<compile_context>
chip_gen: v6e
topology: v6e:2x2x1
jax: 0.10.0
libtpu: 0.0.40
codegen_flags: <defaults>
</compile_context>

<pallas_src>
import functools
import math

import jax
import jax.numpy as jnp
from jax.experimental import pallas as pl
from jax.experimental.pallas import tpu as pltpu


def _round_up(x, m):
    return ((x + m - 1) // m) * m


def _arb_loss_kernel(out_ref, lab_ref, loss_ref, counts_ref, term_ref, *,
                     n_true, scale):
    # out_ref:    (TB, Cp) f32  VMEM   padded probabilities tile
    # lab_ref:    (TB, 1)  i32  VMEM   labels tile (-1 marks a padded row)
    # loss_ref:   (1, 1)   f32  SMEM   scalar output
    # counts_ref: (1, Cp)  f32  VMEM   per-class count accumulator
    # term_ref:   (1, 1)   f32  VMEM   sum_i [log(rowsum_i) - log(picked_i)]
    step = pl.program_id(0)

    @pl.when(step == 0)
    def _init():
        counts_ref[...] = jnp.zeros_like(counts_ref)
        term_ref[...] = jnp.zeros_like(term_ref)

    out = out_ref[...]                                   # (TB, Cp)
    lab = lab_ref[...]                                   # (TB, 1)
    tb, cp = out.shape

    classes = jax.lax.broadcasted_iota(jnp.int32, (tb, cp), 1)
    onehot = (lab == classes).astype(jnp.float32)        # all-zero row if lab == -1

    # Class counts over the full batch (padded classes / rows contribute 0).
    counts_ref[...] += jnp.sum(onehot, axis=0, keepdims=True)     # (1, Cp)

    valid = lab >= 0                                              # (TB, 1)
    picked = jnp.sum(onehot * out, axis=1, keepdims=True)         # output[i, y_i]
    row_sum = jnp.sum(out, axis=1, keepdims=True)                 # sum_c output[i, c]
    picked = jnp.where(valid, picked, 1.0)
    row_sum = jnp.where(valid, row_sum, 1.0)
    term_ref[...] += jnp.sum(jnp.log(row_sum) - jnp.log(picked), keepdims=True)

    @pl.when(step == pl.num_programs(0) - 1)
    def _finalize():
        cnt = counts_ref[...]                                     # (1, Cp)
        cnt_term = jnp.sum(cnt * jnp.log(jnp.maximum(cnt, 1.0)))  # 0 for empty classes
        total = jnp.sum(term_ref[...]) - cnt_term + n_true * math.log(n_true)
        loss_ref[0, 0] = total * scale


def arb_loss(output, y, *, reduction="mean", block_batch=128):
    """Forward pass of ARBLoss. Returns a scalar float32 loss."""
    n, c = output.shape
    if reduction == "mean":
        scale = 1.0 / float(n)
    elif reduction == "sum":
        scale = 1.0
    else:
        raise ValueError(f"unsupported reduction: {reduction}")
    # TODO(synk): reduction='none' (per-sample loss vector output) is not implemented.

    c_pad = _round_up(c, 128)                              # lane-dense class axis
    tb = min(_round_up(n, 8), _round_up(block_batch, 8))   # batch tile (sublane mult of 8)
    n_pad = _round_up(n, tb)

    out_pad = jnp.zeros((n_pad, c_pad), jnp.float32)
    out_pad = out_pad.at[:n, :c].set(output.astype(jnp.float32))
    lab_pad = jnp.full((n_pad, 1), -1, jnp.int32)
    lab_pad = lab_pad.at[:n, 0].set(y.astype(jnp.int32))

    kernel = functools.partial(_arb_loss_kernel, n_true=float(n), scale=scale)

    cost = pl.CostEstimate(
        flops=6 * n_pad * c_pad,
        transcendentals=2 * n_pad + c_pad,
        bytes_accessed=out_pad.size * 4 + lab_pad.size * 4 + 4,
    )

    loss = pl.pallas_call(
        kernel,
        out_shape=jax.ShapeDtypeStruct((1, 1), jnp.float32),
        grid=(n_pad // tb,),
        in_specs=[
            pl.BlockSpec((tb, c_pad), lambda i: (i, 0)),
            pl.BlockSpec((tb, 1), lambda i: (i, 0)),
        ],
        out_specs=pl.BlockSpec(memory_space=pltpu.SMEM),
        scratch_shapes=[
            pltpu.VMEM((1, c_pad), jnp.float32),    # class-count accumulator
            pltpu.VMEM((1, 1), jnp.float32),        # scalar term accumulator
        ],
        compiler_params=pltpu.CompilerParams(
            dimension_semantics=("arbitrary",)),    # batch axis carries accumulators
        cost_estimate=cost,
    )(out_pad, lab_pad)

    return loss[0, 0]


def _reference(output, y):
    # Pure-JAX mirror of the PyTorch forward (reduction='mean'), for validation.
    n, c = output.shape
    counts = jnp.sum((y[:, None] == jnp.arange(c)[None, :]).astype(jnp.float32), axis=0)
    w = counts[y]                                         # (n,) count of each sample's class
    tmp_sum = (n / w) * jnp.sum(output, axis=1)           # (n,)
    log_logit = jnp.log(output / tmp_sum[:, None])        # (n, c)
    nll = -log_logit[jnp.arange(n), y]
    return jnp.mean(nll)


if __name__ == "__main__":
    key = jax.random.PRNGKey(0)
    k_o, k_y = jax.random.split(key)

    n, num_classes = 48, 10
    logits = jax.random.normal(k_o, (n, num_classes), dtype=jnp.float32)
    output = jax.nn.softmax(logits, axis=-1)              # positive "probabilities"
    y = jax.random.randint(k_y, (n,), 0, num_classes, dtype=jnp.int32)

    # block_batch=16 -> grid of 3 batch tiles, exercising init/accumulate/finalize.
    loss = arb_loss(output, y, block_batch=16)
    loss = jax.block_until_ready(loss)

    ref = _reference(output, y)
    assert jnp.allclose(loss, ref, rtol=1e-5, atol=1e-4), (loss, ref)

    print("KERNEL_OK")
</pallas_src>

<mosaic_0001>
module attributes {stable_mosaic.version = 11 : i64} {
  func.func @_arb_loss_kernel(%arg0: i32, %arg1: memref<16x128xf32, #tpu.memory_space<vmem>>, %arg2: memref<16x1xi32, #tpu.memory_space<vmem>>, %arg3: memref<1x1xf32, #tpu.memory_space<smem>>, %arg4: memref<1x128xf32, #tpu.memory_space<vmem>>, %arg5: memref<1x1xf32, #tpu.memory_space<vmem>>) attributes {dimension_semantics = [#tpu.dimension_semantics<arbitrary>], iteration_bounds = array<i64: 3>, scalar_prefetch = 0 : i64, scratch_operands = 2 : i64, tpu.core_type = #tpu.core_type<tc>, window_params = [{transform_indices = @transform_0, window_bounds = array<i64: 16, 128>}, {transform_indices = @transform_1, window_bounds = array<i64: 16, 1>}, {transform_indices = @transform_2, window_bounds = array<i64: 1, 1>}]} {
    %c0_i32 = arith.constant 0 : i32
    %0 = arith.cmpi eq, %arg0, %c0_i32 : i32
    %1 = arith.extui %0 : i1 to i32
    %c0_i32_0 = arith.constant 0 : i32
    %2 = arith.cmpi ne, %1, %c0_i32_0 : i32
    scf.if %2 {
      %cst_19 = arith.constant 0.000000e+00 : f32
      %40 = vector.broadcast %cst_19 : f32 to vector<1x128xf32>
      %c0_20 = arith.constant 0 : index
      %c0_21 = arith.constant 0 : index
      %41 = vector.load %arg4[%c0_20, %c0_21] : memref<1x128xf32, #tpu.memory_space<vmem>>, vector<1x128xf32>
      tpu.vector_store %arg4[%c0_20, %c0_21], %40 {strides = array<i32>} : memref<1x128xf32, #tpu.memory_space<vmem>>, vector<1x128xf32>,
      %cst_22 = arith.constant 0.000000e+00 : f32
      %42 = vector.broadcast %cst_22 : f32 to vector<1x1xf32>
      %c0_23 = arith.constant 0 : index
      %c0_24 = arith.constant 0 : index
      %43 = vector.load %arg5[%c0_23, %c0_24] : memref<1x1xf32, #tpu.memory_space<vmem>>, vector<1x1xf32>
      tpu.vector_store %arg5[%c0_23, %c0_24], %42 {strides = array<i32>} : memref<1x1xf32, #tpu.memory_space<vmem>>, vector<1x1xf32>,
    } else {
    }
    %c0 = arith.constant 0 : index
    %c0_1 = arith.constant 0 : index
    %3 = vector.load %arg1[%c0, %c0_1] : memref<16x128xf32, #tpu.memory_space<vmem>>, vector<16x128xf32>
    %c0_2 = arith.constant 0 : index
    %c0_3 = arith.constant 0 : index
    %4 = vector.load %arg2[%c0_2, %c0_3] : memref<16x1xi32, #tpu.memory_space<vmem>>, vector<16x1xi32>
    %5 = tpu.iota {dimensions = array<i32: 1>} : vector<16x128xi32>
    %6 = vector.broadcast %4 : vector<16x1xi32> to vector<16x128xi32>
    %7 = arith.cmpi eq, %6, %5 : vector<16x128xi32>
    %8 = arith.extui %7 : vector<16x128xi1> to vector<16x128xi32>
    %9 = arith.sitofp %8 : vector<16x128xi32> to vector<16x128xf32>
    %c0_4 = arith.constant 0 : index
    %c0_5 = arith.constant 0 : index
    %10 = vector.load %arg4[%c0_4, %c0_5] : memref<1x128xf32, #tpu.memory_space<vmem>>, vector<1x128xf32>
    %cst = arith.constant dense<0.000000e+00> : vector<128xf32>
    %11 = vector.multi_reduction <add>, %9, %cst [0] : vector<16x128xf32> to vector<128xf32>
    %12 = vector.shape_cast %11 : vector<128xf32> to vector<1x128xf32>
    %13 = arith.addf %10, %12 : vector<1x128xf32>
    %c0_6 = arith.constant 0 : index
    %c0_7 = arith.constant 0 : index
    %14 = vector.load %arg4[%c0_6, %c0_7] : memref<1x128xf32, #tpu.memory_space<vmem>>, vector<1x128xf32>
    tpu.vector_store %arg4[%c0_6, %c0_7], %13 {strides = array<i32>} : memref<1x128xf32, #tpu.memory_space<vmem>>, vector<1x128xf32>,
    %c0_i32_8 = arith.constant 0 : i32
    %15 = vector.broadcast %c0_i32_8 : i32 to vector<16x1xi32>
    %16 = arith.cmpi sge, %4, %15 : vector<16x1xi32>
    %17 = arith.mulf %9, %3 : vector<16x128xf32>
    %cst_9 = arith.constant dense<0.000000e+00> : vector<16xf32>
    %18 = vector.multi_reduction <add>, %17, %cst_9 [1] : vector<16x128xf32> to vector<16xf32>
    %19 = vector.shape_cast %18 : vector<16xf32> to vector<16x1xf32>
    %cst_10 = arith.constant dense<0.000000e+00> : vector<16xf32>
    %20 = vector.multi_reduction <add>, %3, %cst_10 [1] : vector<16x128xf32> to vector<16xf32>
    %21 = vector.shape_cast %20 : vector<16xf32> to vector<16x1xf32>
    %cst_11 = arith.constant 1.000000e+00 : f32
    %22 = vector.broadcast %cst_11 : f32 to vector<16x1xf32>
    %23 = arith.select %16, %19, %22 : vector<16x1xi1>, vector<16x1xf32>
    %cst_12 = arith.constant 1.000000e+00 : f32
    %24 = vector.broadcast %cst_12 : f32 to vector<16x1xf32>
    %25 = arith.select %16, %21, %24 : vector<16x1xi1>, vector<16x1xf32>
    %c0_13 = arith.constant 0 : index
    %c0_14 = arith.constant 0 : index
    %26 = vector.load %arg5[%c0_13, %c0_14] : memref<1x1xf32, #tpu.memory_space<vmem>>, vector<1x1xf32>
    %27 = math.log %25 : vector<16x1xf32>
    %28 = math.log %23 : vector<16x1xf32>
    %29 = arith.subf %27, %28 : vector<16x1xf32>
    %30 = vector.shape_cast %29 : vector<16x1xf32> to vector<1x16x1xf32>
    %cst_15 = arith.constant dense<0.000000e+00> : vector<1xf32>
    %31 = vector.multi_reduction <add>, %30, %cst_15 [1, 2] : vector<1x16x1xf32> to vector<1xf32>
    %32 = vector.shape_cast %31 : vector<1xf32> to vector<1x1x1xf32>
    %33 = vector.extract %32[0, 0, 0] : f32 from vector<1x1x1xf32>
    %34 = vector.broadcast %33 : f32 to vector<1x1xf32>
    %35 = arith.addf %26, %34 : vector<1x1xf32>
    %c0_16 = arith.constant 0 : index
    %c0_17 = arith.constant 0 : index
    %36 = vector.load %arg5[%c0_16, %c0_17] : memref<1x1xf32, #tpu.memory_space<vmem>>, vector<1x1xf32>
    tpu.vector_store %arg5[%c0_16, %c0_17], %35 {strides = array<i32>} : memref<1x1xf32, #tpu.memory_space<vmem>>, vector<1x1xf32>,
    %c2_i32 = arith.constant 2 : i32
    %37 = arith.cmpi eq, %arg0, %c2_i32 : i32
    %38 = arith.extui %37 : i1 to i32
    %c0_i32_18 = arith.constant 0 : i32
    %39 = arith.cmpi ne, %38, %c0_i32_18 : i32
    scf.if %39 {
      %c0_19 = arith.constant 0 : index
      %c0_20 = arith.constant 0 : index
      %40 = vector.load %arg4[%c0_19, %c0_20] : memref<1x128xf32, #tpu.memory_space<vmem>>, vector<1x128xf32>
      %cst_21 = arith.constant 1.000000e+00 : f32
      %41 = vector.broadcast %cst_21 : f32 to vector<1x128xf32>
      %42 = arith.maximumf %40, %41 : vector<1x128xf32>
      %43 = math.log %42 : vector<1x128xf32>
      %44 = arith.mulf %40, %43 : vector<1x128xf32>
      %45 = vector.shape_cast %44 : vector<1x128xf32> to vector<1x1x128xf32>
      %cst_22 = arith.constant dense<0.000000e+00> : vector<1xf32>
      %46 = vector.multi_reduction <add>, %45, %cst_22 [1, 2] : vector<1x1x128xf32> to vector<1xf32>
      %47 = vector.shape_cast %46 : vector<1xf32> to vector<1x1x1xf32>
      %48 = vector.extract %47[0, 0, 0] : f32 from vector<1x1x1xf32>
      %c0_23 = arith.constant 0 : index
      %c0_24 = arith.constant 0 : index
      %49 = vector.load %arg5[%c0_23, %c0_24] : memref<1x1xf32, #tpu.memory_space<vmem>>, vector<1x1xf32>
      %50 = vector.shape_cast %49 : vector<1x1xf32> to vector<1x1x1xf32>
      %cst_25 = arith.constant dense<0.000000e+00> : vector<1xf32>
      %51 = vector.multi_reduction <add>, %50, %cst_25 [1, 2] : vector<1x1x1xf32> to vector<1xf32>
      %52 = vector.shape_cast %51 : vector<1xf32> to vector<1x1x1xf32>
      %53 = vector.extract %52[0, 0, 0] : f32 from vector<1x1x1xf32>
      %54 = arith.subf %53, %48 : f32
      %cst_26 = arith.constant 185.817642 : f32
      %55 = arith.addf %54, %cst_26 : f32
      %cst_27 = arith.constant 0.020833334 : f32
      %56 = arith.mulf %55, %cst_27 : f32
      %c0_28 = arith.constant 0 : index
      %c0_29 = arith.constant 0 : index
      %57 = memref.load %arg3[%c0_28, %c0_29] : memref<1x1xf32, #tpu.memory_space<smem>>
      memref.store %56, %arg3[%c0_28, %c0_29] : memref<1x1xf32, #tpu.memory_space<smem>>
    } else {
    }
    return
  }
  func.func @transform_0(%arg0: i32) -> (i32, i32) {
    %c0_i32 = arith.constant 0 : i32
    %c0_i32_0 = arith.constant 0 : i32
    return %arg0, %c0_i32 : i32, i32
  }
  func.func @transform_1(%arg0: i32) -> (i32, i32) {
    %c0_i32 = arith.constant 0 : i32
    %c0_i32_0 = arith.constant 0 : i32
    return %arg0, %c0_i32 : i32, i32
  }
  func.func @transform_2(%arg0: i32) -> (i32, i32) {
    %c0_i32 = arith.constant 0 : i32
    %c0_i32_0 = arith.constant 0 : i32
    %c0_i32_1 = arith.constant 0 : i32
    return %c0_i32, %c0_i32_0 : i32, i32
  }
}

</mosaic_0001>

<llo_original>
// kernel: tpu_custom_call.1
$region0: #{tpu_custom_call.1}
  #allocation0 [shape = 'u32[]', space=smem, size = 0x4, offset = 0x4, fixed_abs, tag = 'smem constant byte address 0x4 - core index']
  #allocation1 [shape = 'u32[144,128]{1,0:T(1,128)}', space=vmem, size = 0x12000, scoped, tag = 'internal scratch']
  #allocation2 [shape = 'f32[1,128]{1,0:T(1,128)}', space=vmem, size = 0x200, scoped, tag = 'scratch operand']
  #allocation3 [shape = 'f32[1,1]{1,0:T(1,128)}', space=vmem, size = 0x200, scoped, tag = 'scratch operand']
  %s0 = inlined_call_operand.vmem [shape: f32[48,128], index: 0, kind: input, shape index: {}]
  %s1 = inlined_call_operand.vmem [shape: s32[48,1], index: 1, kind: input, shape index: {}]
  %s2 = inlined_call_operand.hbm [shape: f32[1,1], index: 2, kind: output, shape index: {}]
  %s3 = sld [smem:[#allocation0]]
  $region49: #{tpu_custom_call.1} parent=0
    _
  %s5 = ssub.s32 1, %s3
  %s6 = scalar_select 0, %s5, %s3
  $region1: #{tpu_custom_call.1} parent=0
    #allocation4 [shape = 'u8[512]{0}', space=smem, size = 0x200, scoped, tag = 'output window, operand 0, single buffered']
    #allocation5 [shape = 's32[2]{0}', space=sflag, size = 0x8, scoped, tag = 'scoped memory for tpu_custom_call.1']
    %7 = vsyncpa [#allocation5], 0
    loop: start=0, step=1, limit=5
    $region2: #{tpu_custom_call.1} parent=1 // loop_pre_header
      _
    $region3: #{tpu_custom_call.1} parent=1 // loop_header
      %s9 = sphi 0, %s13
      %p10 = scmp.ge.s32.totalorder %s9, 5
      %s19 = sphi 0, %s21
      %s22 = sphi 0, %s19
      %s23 = sphi 0, %s22
      %s39 = sphi 0, %s23
      %s45 = sphi 0, %s47
      %s48 = sphi 0, %s45
      %s49 = sphi 0, %s48
      %s65 = sphi 0, %s49
      %s69 = sphi 0, %s69
      %s71 = sphi 0, %s69
      %s72 = sphi 0, %s71
      %s86 = sphi 0, %s72
    $region4: #{tpu_custom_call.1} parent=1 // loop_header_branch
      %12 = sbr.rel (%p10) target = $region8
    $region5: #{tpu_custom_call.1} parent=1 // loop_body
      %s14 = ssub.s32 %s9, 1
      %s15 = ssub.s32 %s9, 2
      %s16 = sadd.s32 %s9, 1
      %s17 = ssub.s32 %s9, %s16
      %p18 = scmp.eq.s32.totalorder %s17, 0
      %s20 = sadd.s32 %s19, 1
      %s21 = scalar_select %p18, %s19, %s20
      %p24 = pneg %p18
      %p25 = scmp.eq.s32.totalorder %s9, 2
      %p26 = por %p24, %p25
      %p27 = scmp.ne.s32.totalorder %s19, %s22
      %p28 = scmp.eq.s32.totalorder %s9, 0
      %p29 = por %p27, %p28
      %p30 = scmp.ne.s32.totalorder %s19, %s22
      %p31 = scmp.eq.s32.totalorder %s14, 2
      %p32 = por %p30, %p31
      %p33 = scmp.ne.s32.totalorder %s22, %s23
      %p34 = scmp.eq.s32.totalorder %s14, 0
      %p35 = por %p33, %p34
      %p36 = scmp.ne.s32.totalorder %s22, %s23
      %p37 = scmp.eq.s32.totalorder %s15, 2
      %p38 = por %p36, %p37
      %p40 = scmp.ne.s32.totalorder %s23, %s39
      %p41 = scmp.eq.s32.totalorder %s15, 0
      %p42 = por %p40, %p41
      %s43 = ssub.s32 %s9, %s16
      %p44 = scmp.eq.s32.totalorder %s43, 0
      %s46 = sadd.s32 %s45, 1
      %s47 = scalar_select %p44, %s45, %s46
      %p50 = pneg %p44
      %p51 = scmp.eq.s32.totalorder %s9, 2
      %p52 = por %p50, %p51
      %p53 = scmp.ne.s32.totalorder %s45, %s48
      %p54 = scmp.eq.s32.totalorder %s9, 0
      %p55 = por %p53, %p54
      %p56 = scmp.ne.s32.totalorder %s45, %s48
      %p57 = scmp.eq.s32.totalorder %s14, 2
      %p58 = por %p56, %p57
      %p59 = scmp.ne.s32.totalorder %s48, %s49
      %p60 = scmp.eq.s32.totalorder %s14, 0
      %p61 = por %p59, %p60
      %p62 = scmp.ne.s32.totalorder %s48, %s49
      %p63 = scmp.eq.s32.totalorder %s15, 2
      %p64 = por %p62, %p63
      %p66 = scmp.ne.s32.totalorder %s49, %s65
      %p67 = scmp.eq.s32.totalorder %s15, 0
      %p68 = por %p66, %p67
      %s70 = sadd.s32 %s69, 1
      %p73 = scmp.eq.s32.totalorder %s9, 2
      %p74 = scmp.ne.s32.totalorder %s69, %s71
      %p75 = scmp.eq.s32.totalorder %s9, 0
      %p76 = por %p74, %p75
      %p77 = scmp.ne.s32.totalorder %s69, %s71
      %p78 = scmp.eq.s32.totalorder %s14, 2
      %p79 = por %p77, %p78
      %p80 = scmp.ne.s32.totalorder %s71, %s72
      %p81 = scmp.eq.s32.totalorder %s14, 0
      %p82 = por %p80, %p81
      %p83 = scmp.ne.s32.totalorder %s71, %s72
      %p84 = scmp.eq.s32.totalorder %s15, 2
      %p85 = por %p83, %p84
      %p87 = scmp.ne.s32.totalorder %s72, %s86
      %p88 = scmp.eq.s32.totalorder %s15, 0
      %p89 = por %p87, %p88
      %p90 = scmp.le.s32.totalorder 1, %s9
      %p91 = scmp.lt.s32.totalorder %s9, 4
      %p92 = pnand %p90, %p91
      %p93 = pneg %p92
      // Predicated region
      $region9: #{tpu_custom_call.1} parent=5 // pred_check
        _
      $region10: #{tpu_custom_call.1} parent=5 // pred_check_branch
        %95 = sbr.rel (%p92) target = $region12
      $region11: #{tpu_custom_call.1} parent=5 // pred_region
        %s96 = ssub.s32 %s9, 1
      $region12: #{tpu_custom_call.1} parent=5 // pred_fallthru
        _
      %p97 = scmp.lt.s32.totalorder %s9, 3
      // Predicated region
      $region13: #{tpu_custom_call.1} parent=5 // pred_check
        %p98 = pneg %p97
      $region14: #{tpu_custom_call.1} parent=5 // pred_check_branch
        %100 = sbr.rel (%p98) target = $region16
      $region15: #{tpu_custom_call.1} parent=5 // pred_region
        // Predicated region
        $region17: #{tpu_custom_call.1} parent=15 // pred_check
          %p101 = pneg %p29
        $region18: #{tpu_custom_call.1} parent=15 // pred_check_branch
          %103 = sbr.rel (%p101) target = $region20
        $region19: #{tpu_custom_call.1} parent=15 // pred_region
          %s104 = smul.u32 2, %s9
          %p105 = scmp.lt.s32.totalorder %s104, 5
          %s106 = scalar_select %p105, %s104, 5
          %s107 = smul.addr %s106, 8
          %s108 = scalar_lea.vmem %s0, %s107
          %s109 = smul.u32 2, %s9
        $region20: #{tpu_custom_call.1} parent=15 // pred_fallthru
          _
        // Predicated region
        $region21: #{tpu_custom_call.1} parent=15 // pred_check
          %p110 = pneg %p55
        $region22: #{tpu_custom_call.1} parent=15 // pred_check_branch
          %112 = sbr.rel (%p110) target = $region24
        $region23: #{tpu_custom_call.1} parent=15 // pred_region
          %s113 = smul.u32 2, %s9
          %p114 = scmp.lt.s32.totalorder %s113, 5
          %s115 = scalar_select %p114, %s113, 5
          %s116 = smul.addr %s115, 8
          %s117 = scalar_lea.vmem %s1, %s116
          %s118 = smul.u32 2, %s9
        $region24: #{tpu_custom_call.1} parent=15 // pred_fallthru
          _
      $region16: #{tpu_custom_call.1} parent=5 // pred_fallthru
        _
      %p119 = scmp.le.s32.totalorder 1, %s9
      %p120 = scmp.lt.s32.totalorder %s9, 4
      %p121 = pnand %p119, %p120
      %p122 = pneg %p121
      // Predicated region
      $region25: #{tpu_custom_call.1} parent=5 // pred_check
        _
      $region26: #{tpu_custom_call.1} parent=5 // pred_check_branch
        %124 = sbr.rel (%p121) target = $region28
      $region27: #{tpu_custom_call.1} parent=5 // pred_region
        %s125 = ssub.s32 %s9, 1
        %s126 = smul.u32 2, %s14
        %p127 = scmp.lt.s32.totalorder %s126, 5
        %s128 = scalar_select %p127, %s126, 5
        %s129 = smul.addr %s128, 8
        %s130 = scalar_lea.vmem %s0, %s129
        %p131 = pneg %p35
        %p132 = pneg %p32
        %s133 = smul.u32 2, %s14
        %p134 = scmp.lt.s32.totalorder %s133, 5
        %s135 = scalar_select %p134, %s133, 5
        %s136 = smul.addr %s135, 8
        %s137 = scalar_lea.vmem %s1, %s136
        %p138 = pneg %p61
        %p139 = pneg %p58
        %p140 = pneg %p82
        %p141 = pneg %p79
        %s142 = smul.u32 2, %s14
        %p143 = scmp.lt.s32.totalorder %s142, 5
        %s144 = scalar_select %p143, %s142, 5
        %s145 = smul.addr %s144, 8
        %s146 = scalar_lea.vmem %s0, %s145
        %s147 = smul.u32 2, %s14
        %s148 = smul.u32 2, %s14
        %p149 = scmp.lt.s32.totalorder %s148, 5
        %s150 = scalar_select %p149, %s148, 5
        %s151 = smul.addr %s150, 8
        %s152 = scalar_lea.vmem %s1, %s151
        %s153 = smul.u32 2, %s14
        %p154 = scmp.eq.s32.totalorder %s14, 0
        // Predicated region
        $region29: #{tpu_custom_call.1} parent=27 // pred_check
          %p155 = pneg %p154
        $region30: #{tpu_custom_call.1} parent=27 // pred_check_branch
          %157 = sbr.rel (%p155) target = $region32
        $region31: #{tpu_custom_call.1} parent=27 // pred_region
          %158 = vst [vmem:[#allocation2] sm:$0x1] 0.0
          %vm159 = vcmask 0
          %160 = vst.msk [vmem:[#allocation3] sm:$0x1] %vm159, 0.0
        $region32: #{tpu_custom_call.1} parent=27 // pred_fallthru
          _
        %v161 = vld [vmem:[%s146] sm:$0xff]
        %v162 = vld [vmem:[%s146 + $0x8] sm:$0xff]
        %v163 = vld [vmem:[%s152] sm:$0xff]
        %v164 = vld [vmem:[%s152 + $0x8] sm:$0xff]
        %v165 = vlaneseq
        %v166 = vand.u32 %v165, 127
        %167 = vset.pattern.permute.xlu0 0
        %168 = vperm.xlu0 %167, %v163
        %v169 = vpop.permute.xlu0 %168
        %170 = vset.pattern.permute.xlu0 0
        %171 = vperm.xlu0 %170, %v164
        %v172 = vpop.permute.xlu0 %171
        %vm173 = vcmp.eq.s32.totalorder %v169, %v166
        %vm174 = vcmp.eq.s32.totalorder %v172, %v166
        %v175 = vsel %vm173, 1, 0
        %v176 = vsel %vm174, 1, 0
        %v177 = vcvt.s32.f32 %v175
        %v178 = vcvt.s32.f32 %v176
        %v179 = vld [vmem:[#allocation2] sm:$0x1]
        %v180 = vadd.f32 %v177, %v178
        %v181 = vrot.slane %v180, 4
        %v182 = vadd.f32 %v180, %v181
        %v183 = vrot.slane %v182, 2
        %v184 = vadd.f32 %v182, %v183
        %v185 = vrot.slane %v184, 1
        %v186 = vadd.f32 %v184, %v185
        %v187 = vadd.f32 %v179, %v186
        %188 = vst [vmem:[#allocation2] sm:$0x1] %v187
        %vm189 = vcmp.ge.s32.totalorder %v163, 0
        %vm190 = vcmp.ge.s32.totalorder %v164, 0
        %v191 = vmul.f32 %v177, %v161
        %v192 = vmul.f32 %v178, %v162
        %193 = vadd.xlane.f32.xlu0 %v191
        %v194 = vpop.xlane.xlu0 %193
        %195 = vadd.xlane.f32.xlu0 %v192
        %v196 = vpop.xlane.xlu0 %195
        %197 = vadd.xlane.f32.xlu0 %v161
        %v198 = vpop.xlane.xlu0 %197
        %199 = vadd.xlane.f32.xlu0 %v162
        %v200 = vpop.xlane.xlu0 %199
        %v201 = vsel %vm189, %v194, 1.0
        %v202 = vsel %vm190, %v196, 1.0
        %v203 = vsel %vm189, %v198, 1.0
        %v204 = vsel %vm190, %v200, 1.0
        %v205 = vld [vmem:[#allocation3] sm:$0x1]
        %v206 = vlog2.pop %v203
        %v207 = vmul.f32 %v206, 0.6931472
        %v208 = vlog2.pop %v204
        %v209 = vmul.f32 %v208, 0.6931472
        %v210 = vlog2.pop %v201
        %v211 = vmul.f32 %v210, 0.6931472
        %v212 = vlog2.pop %v202
        %v213 = vmul.f32 %v212, 0.6931472
        %v214 = vsub.f32 %v207, %v211
        %v215 = vsub.f32 %v209, %v213
        %vm216 = vcmask 7168
        %v217 = vsel %vm216, %v214, 0.0
        %v218 = vsel %vm216, %v215, 0.0
        %v219 = vadd.f32 %v217, %v218
        %220 = vadd.xlane.f32.xlu0 %v219
        %v221 = vpop.xlane.xlu0 %220
        %v222 = vrot.slane %v221, 4
        %v223 = vadd.f32 %v221, %v222
        %v224 = vrot.slane %v223, 2
        %v225 = vadd.f32 %v223, %v224
        %v226 = vrot.slane %v225, 1
        %v227 = vadd.f32 %v225, %v226
        %s228 = vtos %v227
        %v229 = vstv %s228
        %v230 = vadd.f32 %v205, %v229
        %vm231 = vcmask 0
        %232 = vst.msk [vmem:[#allocation3] sm:$0x1] %vm231, %v230
        %p233 = scmp.eq.s32.totalorder %s14, 2
        // Predicated region
        $region33: #{tpu_custom_call.1} parent=27 // pred_check
          %p234 = pneg %p233
        $region34: #{tpu_custom_call.1} parent=27 // pred_check_branch
          %236 = sbr.rel (%p234) target = $region36
        $region35: #{tpu_custom_call.1} parent=27 // pred_region
          %v237 = vld [vmem:[#allocation2] sm:$0x1]
          %v238 = vmax.f32 %v237, 1.0
          %v239 = vlog2.pop %v238
          %v240 = vmul.f32 %v239, 0.6931472
          %v241 = vmul.f32 %v237, %v240
          %vm242 = vcmask 1040384
          %v243 = vsel %vm242, %v241, 0.0
          %244 = vadd.xlane.f32.xlu0 %v243
          %v245 = vpop.xlane.xlu0 %244
          %v246 = vrot.slane %v245, 4
          %v247 = vadd.f32 %v245, %v246
          %v248 = vrot.slane %v247, 2
          %v249 = vadd.f32 %v247, %v248
          %v250 = vrot.slane %v249, 1
          %v251 = vadd.f32 %v249, %v250
          %s252 = vtos %v251
          %v253 = vld [vmem:[#allocation3] sm:$0x1]
          %v254 = vadd.f32 %v253, 0.0
          %s255 = vtos %v254
          %s256 = ssub.f32 %s255, %s252
          %s257 = sadd.f32 %s256, 185.81764
          %s258 = smul.f32 %s257, 0.020833334
          %s259 = scalar_lea.smem [#allocation4], 0
          %260 = sst [smem:[%s259]] %s258
        $region36: #{tpu_custom_call.1} parent=27 // pred_fallthru
          _
        // Predicated region
        $region37: #{tpu_custom_call.1} parent=27 // pred_check
          %p261 = pneg %p79
        $region38: #{tpu_custom_call.1} parent=27 // pred_check_branch
          %263 = sbr.rel (%p261) target = $region40
        $region39: #{tpu_custom_call.1} parent=27 // pred_region
          %s265 = ssub.s32 16, 16
          %266 = vsyncadd [#allocation5], %s265
          %269 = dma.smem_to_hbm [#allocation4], 16, %s2, [#allocation5]
        $region40: #{tpu_custom_call.1} parent=27 // pred_fallthru
          _
        // Predicated region
        $region41: #{tpu_custom_call.1} parent=27 // pred_check
          %p270 = pneg %p79
        $region42: #{tpu_custom_call.1} parent=27 // pred_check_branch
          %272 = sbr.rel (%p270) target = $region44
        $region43: #{tpu_custom_call.1} parent=27 // pred_region
          %273 = dma.done [#allocation5], 16
        $region44: #{tpu_custom_call.1} parent=27 // pred_fallthru
          _
        %274 = sfence
      $region28: #{tpu_custom_call.1} parent=5 // pred_fallthru
        _
      %p275 = scmp.le.s32.totalorder 2, %s9
      // Predicated region
      $region45: #{tpu_custom_call.1} parent=5 // pred_check
        %p276 = pneg %p275
      $region46: #{tpu_custom_call.1} parent=5 // pred_check_branch
        %278 = sbr.rel (%p276) target = $region48
      $region47: #{tpu_custom_call.1} parent=5 // pred_region
        %s279 = ssub.s32 %s9, 2
      $region48: #{tpu_custom_call.1} parent=5 // pred_fallthru
        _
    $region6: #{tpu_custom_call.1} parent=1 // loop_footer
      %s13 = sadd.s32 1, %s9
    $region7: #{tpu_custom_call.1} parent=1 // loop_footer_branch
      %8 = sbr.rel target = $region3
    $region8: #{tpu_custom_call.1} parent=1 // loop_exit
      _
    %280 = vsyncpa [#allocation5], 1
    %s281 = scalar_lea.sflag [#allocation5], 1
    %282 = vsyncpa %s281, 1

</llo_original>
